<compile_context>
chip_gen: v7x
topology: tpu7x:2x2x1
jax: 0.10.0
libtpu: 0.0.40
codegen_flags: <defaults>
</compile_context>

<pallas_src>
import functools

import jax
import jax.numpy as jnp
from jax.experimental import pallas as pl
from jax.experimental.pallas import tpu as pltpu

LANE = 128

# Desired tile sizes (clamped to the 128-rounded problem size by the wrappers
# so small test graphs do not over-pad).
AGG_TM = 512          # dst-row tile of the aggregation kernel
AGG_TK = 1024         # src-row (reduction) tile of the aggregation kernel
PROJ_TILE = 1024      # row tile of the projection kernel
VMEM_LIMIT = 48 * 1024 * 1024   # explicit scoped-VMEM budget (fits v7x 64 MiB)


def _round_up(x, m):
    return (x + m - 1) // m * m


def _pad2d(x, rows=None, cols=None):
    pr = 0 if rows is None else rows - x.shape[0]
    pc = 0 if cols is None else cols - x.shape[1]
    if pr or pc:
        x = jnp.pad(x, ((0, pr), (0, pc)))
    return x


# ---------------------------------------------------------------------------
# Kernel 1: fused projection  P = H @ [W_self | W_neigh]   (bf16 MXU, f32 acc)
# ---------------------------------------------------------------------------
def _project_kernel(h_ref, w_ref, p_ref):
    p_ref[...] = jnp.dot(h_ref[...], w_ref[...],
                         preferred_element_type=jnp.float32).astype(p_ref.dtype)


def project(h_bf16, w_cat_bf16, *, tile):
    n, f_in = h_bf16.shape
    two_fp = w_cat_bf16.shape[1]
    assert n % tile == 0
    return pl.pallas_call(
        _project_kernel,
        out_shape=jax.ShapeDtypeStruct((n, two_fp), jnp.bfloat16),
        grid=(n // tile,),
        in_specs=[
            pl.BlockSpec((tile, f_in), lambda i: (i, 0)),      # H row tile (bf16)
            pl.BlockSpec((f_in, two_fp), lambda i: (0, 0)),    # resident bf16 weights
        ],
        out_specs=pl.BlockSpec((tile, two_fp), lambda i: (i, 0)),
        compiler_params=pltpu.CompilerParams(
            dimension_semantics=("parallel",),
            vmem_limit_bytes=VMEM_LIMIT),
    )(h_bf16, w_cat_bf16)


# ---------------------------------------------------------------------------
# Kernel 2: tiled mean-aggregation + combine + bias (+ ReLU)
#   out[i] = (sum_k A[i,k] @ P_neigh[k]) * inv_deg[i] + P_self[i] + bias
# ---------------------------------------------------------------------------
def _agg_kernel(a_ref, p_neigh_ref, p_self_ref, inv_deg_ref, b_ref,
                o_ref, acc_ref, *, apply_relu):
    k = pl.program_id(1)

    @pl.when(k == 0)
    def _():
        acc_ref[...] = jnp.zeros_like(acc_ref)

    # int8 {0,1} adjacency tile -> bf16 on the VPU (free: loop is HBM/MXU
    # bound), then bf16 x bf16 MXU matmul with f32 accumulation.
    a = a_ref[...].astype(jnp.float32).astype(jnp.bfloat16)
    acc_ref[...] += jnp.dot(a, p_neigh_ref[...],
                            preferred_element_type=jnp.float32)

    @pl.when(k == pl.num_programs(1) - 1)
    def _():
        out = (acc_ref[...] * inv_deg_ref[...]           # exact mean scale (f32)
               + p_self_ref[...].astype(jnp.float32)     # self projection
               + b_ref[...])                             # bias
        if apply_relu:
            out = jnp.maximum(out, 0.0)
        o_ref[...] = out.astype(o_ref.dtype)


def aggregate(adj_i8, p, inv_deg, bias, *, apply_relu, out_dtype, tm, tk):
    n_dst, n_src = adj_i8.shape
    two_fp = p.shape[1]
    fp = two_fp // 2
    assert n_dst % tm == 0 and n_src % tk == 0
    kern = functools.partial(_agg_kernel, apply_relu=apply_relu)
    return pl.pallas_call(
        kern,
        out_shape=jax.ShapeDtypeStruct((n_dst, fp), out_dtype),
        grid=(n_dst // tm, n_src // tk),
        in_specs=[
            pl.BlockSpec((tm, tk), lambda i, k: (i, k)),   # A mask tile (int8)
            pl.BlockSpec((tk, fp), lambda i, k: (k, 1)),   # P[:, fp:]  neighbor proj
            pl.BlockSpec((tm, fp), lambda i, k: (i, 0)),   # P[:, :fp]  self proj (dst rows)
            pl.BlockSpec((tm, 1), lambda i, k: (i, 0)),    # 1/deg
            pl.BlockSpec((1, fp), lambda i, k: (0, 0)),    # bias
        ],
        out_specs=pl.BlockSpec((tm, fp), lambda i, k: (i, 0)),
        scratch_shapes=[pltpu.VMEM((tm, fp), jnp.float32)],
        compiler_params=pltpu.CompilerParams(
            dimension_semantics=("parallel", "arbitrary"),
            vmem_limit_bytes=VMEM_LIMIT),
    )(adj_i8, p, p, inv_deg, bias)


# ---------------------------------------------------------------------------
# One-time preprocessing (hoisted out of the forward path)
# ---------------------------------------------------------------------------
def prepare_block(adj_mask, inv_deg, *, tm=AGG_TM, tk=AGG_TK):
    """Pad the {0,1} adjacency to tile multiples and store it as int8 in HBM
    (1 B/elem); pad 1/deg. Done once per graph, not once per forward call."""
    n_dst, n_src = adj_mask.shape
    tm = min(tm, _round_up(n_dst, LANE))
    tk = min(tk, _round_up(n_src, LANE))
    n_dst_p = _round_up(n_dst, tm)
    n_src_p = _round_up(n_src, tk)
    adj_i8 = _pad2d(adj_mask, n_dst_p, n_src_p).astype(jnp.int8)
    inv_deg_p = _pad2d(inv_deg.astype(jnp.float32), n_dst_p, None)
    return dict(adj=adj_i8, inv_deg=inv_deg_p, n_dst=n_dst, n_src=n_src,
                tm=tm, tk=tk)


def prepare_layer_params(w_self, w_neigh, bias):
    """Pad the output dim to a lane multiple, fuse [W_self | W_neigh] into a
    single bf16 operand for one MXU matmul; keep bias f32. One-time."""
    f_in, f_out = w_self.shape
    fp_out = _round_up(f_out, LANE)
    w_cat = jnp.concatenate(
        [_pad2d(w_self, None, fp_out), _pad2d(w_neigh, None, fp_out)],
        axis=1).astype(jnp.bfloat16)                      # (f_in, 2*fp_out)
    bias_p = _pad2d(bias.reshape(1, -1).astype(jnp.float32), None, fp_out)
    return dict(w_cat=w_cat, bias=bias_p, f_in=f_in, f_out=f_out, fp=fp_out)


# ---------------------------------------------------------------------------
# Layer / model drivers
# ---------------------------------------------------------------------------
def sage_layer(block, lp, h, *, apply_relu, out_dtype):
    """One SAGEConv('mean') layer. Dst nodes are the first n_dst rows of the
    src node set (DGL block convention)."""
    adj, inv_deg = block["adj"], block["inv_deg"]
    n_dst, tm, tk = block["n_dst"], block["tm"], block["tk"]
    n_dst_p, n_src_p = adj.shape
    assert h.shape[1] == lp["f_in"]

    h_p = _pad2d(h, n_src_p, None).astype(jnp.bfloat16)

    proj_tile = min(PROJ_TILE, n_src_p)
    if n_src_p % proj_tile:
        proj_tile = tk                                    # tk always divides n_src_p

    p = project(h_p, lp["w_cat"], tile=proj_tile)         # (n_src_p, 2*fp) bf16
    out = aggregate(adj, p, inv_deg, lp["bias"],
                    apply_relu=apply_relu, out_dtype=out_dtype,
                    tm=tm, tk=tk)                         # (n_dst_p, fp)
    # Slice back to the true (n_dst, f_out): next projection's K stays at the
    # real feature width instead of the 128-lane padding.
    return out[:n_dst, :lp["f_out"]]


def sage_forward(prep_blocks, feat, prep_params):
    """Eval-mode equivalent of Sage.forward(blocks, feat).
    TODO(synk): CUDA-event layer-1 timing (fwd_l1_timer) has no TPU/Pallas
    equivalent and is omitted."""
    h = feat.astype(jnp.bfloat16)          # bf16 activations feed the MXU directly
    n_layers = len(prep_params)
    for layer_idx, (block, lp) in enumerate(zip(prep_blocks, prep_params)):
        last = layer_idx == n_layers - 1
        h = sage_layer(block, lp, h, apply_relu=not last,
                       out_dtype=jnp.float32 if last else jnp.bfloat16)
        # TODO(synk): nn.Dropout is identity in eval mode; training-mode dropout
        # (stochastic masking via pltpu.prng_random_bits) intentionally omitted.
    return h


def init_sage_params(key, in_feats, hid_feats, num_layers, out_feats):
    """Deterministic Xavier-uniform init matching SAGEConv parameter shapes."""
    params = []
    for layer_idx in range(num_layers):
        f_in = in_feats if layer_idx == 0 else hid_feats
        f_out = out_feats if layer_idx == num_layers - 1 else hid_feats
        key, k1, k2 = jax.random.split(key, 3)
        bound = (6.0 / (f_in + f_out)) ** 0.5
        w_self = jax.random.uniform(k1, (f_in, f_out), jnp.float32, -bound, bound)
        w_neigh = jax.random.uniform(k2, (f_in, f_out), jnp.float32, -bound, bound)
        bias = jnp.zeros((1, f_out), jnp.float32)
        params.append((w_self, w_neigh, bias))
    return params


def make_block(key, n_dst, n_src, p=0.3):
    """Dense {0,1} adjacency mask + 1/deg vector standing in for a DGL block.
    TODO(synk): real sparse graphs should use a CSR gather kernel
    (PrefetchScalarGridSpec + pl.ds row gather) instead of a dense mask."""
    mask = jax.random.bernoulli(key, p, (n_dst, n_src)).astype(jnp.float32)
    deg = jnp.sum(mask, axis=1, keepdims=True)
    inv_deg = 1.0 / jnp.maximum(deg, 1.0)   # zero-in-degree rows aggregate to 0
    return mask, inv_deg


if __name__ == "__main__":
    # Small shapes (256 nodes) but still exercising the parallel/arbitrary
    # grid, the f32 accumulator reduction and int8->bf16 adjacency streaming.
    num_nodes = 256
    in_feats, hid_feats, out_feats = 32, 32, 16
    num_layers = 3

    key = jax.random.PRNGKey(0)
    k_feat, k_param, *k_blocks = jax.random.split(key, 2 + num_layers)

    feat = jax.random.normal(k_feat, (num_nodes, in_feats), jnp.float32)
    raw_blocks = [make_block(kb, num_nodes, num_nodes) for kb in k_blocks]
    raw_params = init_sage_params(k_param, in_feats, hid_feats, num_layers, out_feats)

    # One-time preprocessing, outside the forward path (per the perf review).
    prep_blocks = [prepare_block(m, d) for (m, d) in raw_blocks]
    prep_params = [prepare_layer_params(*p) for p in raw_params]

    out = sage_forward(prep_blocks, feat, prep_params)
    out = jax.block_until_ready(out)

    # Pure-f32 JAX reference (kernel streams A / P / activations in int8/bf16,
    # so the tolerance is loosened accordingly; accumulation stays f32).
    h_ref = feat
    for layer_idx, ((mask, inv_deg), (w_self, w_neigh, bias)) in enumerate(
            zip(raw_blocks, raw_params)):
        neigh = (mask @ h_ref) * inv_deg
        h_ref = h_ref @ w_self + neigh @ w_neigh + bias
        if layer_idx != num_layers - 1:
            h_ref = jnp.maximum(h_ref, 0.0)

    assert out.shape == (num_nodes, out_feats)
    err = float(jnp.max(jnp.abs(out - h_ref)) / (jnp.max(jnp.abs(h_ref)) + 1e-6))
    assert err < 5e-2, f"max relative error too large: {err}"

    print("KERNEL_OK")
</pallas_src>

<mosaic_0001>
module attributes {stable_mosaic.version = 11 : i64} {
  func.func @_project_kernel(%arg0: i32, %arg1: memref<256x32xbf16, #tpu.memory_space<vmem>>, %arg2: memref<32x256xbf16, #tpu.memory_space<vmem>>, %arg3: memref<256x256xbf16, #tpu.memory_space<vmem>>) attributes {dimension_semantics = [#tpu.dimension_semantics<parallel>], iteration_bounds = array<i64: 1>, scalar_prefetch = 0 : i64, scratch_operands = 0 : i64, tpu.core_type = #tpu.core_type<tc>, window_params = [{transform_indices = @transform_0, window_bounds = array<i64: 256, 32>}, {pipeline_mode = #tpu.pipeline_mode<synchronous>, transform_indices = @transform_1, window_bounds = array<i64: 32, 256>}, {transform_indices = @transform_2, window_bounds = array<i64: 256, 256>}]} {
    %c0 = arith.constant 0 : index
    %c0_0 = arith.constant 0 : index
    %0 = vector.load %arg1[%c0, %c0_0] : memref<256x32xbf16, #tpu.memory_space<vmem>>, vector<256x32xbf16>
    %c0_1 = arith.constant 0 : index
    %c0_2 = arith.constant 0 : index
    %1 = vector.load %arg2[%c0_1, %c0_2] : memref<32x256xbf16, #tpu.memory_space<vmem>>, vector<32x256xbf16>
    %cst = arith.constant dense<0.000000e+00> : vector<256x256xf32>
    %2 = tpu.matmul %0, %1, %cst {dimension_numbers = #tpu.dot_dimension_numbers<[1], [0], [0], [1], [0, 0, 1, 1], [], []>} : vector<256x32xbf16>, vector<32x256xbf16>, vector<256x256xf32> -> vector<256x256xf32>
    %3 = arith.truncf %2 : vector<256x256xf32> to vector<256x256xbf16>
    %c0_3 = arith.constant 0 : index
    %c0_4 = arith.constant 0 : index
    %4 = vector.load %arg3[%c0_3, %c0_4] : memref<256x256xbf16, #tpu.memory_space<vmem>>, vector<256x256xbf16>
    tpu.vector_store %arg3[%c0_3, %c0_4], %3 {strides = array<i32>} : memref<256x256xbf16, #tpu.memory_space<vmem>>, vector<256x256xbf16>,
    return
  }
  func.func @transform_0(%arg0: i32) -> (i32, i32) {
    %c0_i32 = arith.constant 0 : i32
    %c0_i32_0 = arith.constant 0 : i32
    return %arg0, %c0_i32 : i32, i32
  }
  func.func @transform_1(%arg0: i32) -> (i32, i32) {
    %c0_i32 = arith.constant 0 : i32
    %c0_i32_0 = arith.constant 0 : i32
    %c0_i32_1 = arith.constant 0 : i32
    return %c0_i32, %c0_i32_0 : i32, i32
  }
  func.func @transform_2(%arg0: i32) -> (i32, i32) {
    %c0_i32 = arith.constant 0 : i32
    %c0_i32_0 = arith.constant 0 : i32
    return %arg0, %c0_i32 : i32, i32
  }
}

</mosaic_0001>

<llo_original>
// kernel: tpu_custom_call.1
$region0: #{tpu_custom_call.1}
  #allocation0 [shape = 'u32[]', space=smem, size = 0x4, offset = 0x4, fixed_abs, tag = 'smem constant byte address 0x4 - core index']
  #allocation1 [shape = 'u32[144,128]{1,0:T(1,128)}', space=vmem, size = 0x12000, scoped, tag = 'internal scratch']
  %s0 = inlined_call_operand.vmem [shape: bf16[256,32], index: 0, kind: input, shape index: {}]
  %s1 = inlined_call_operand.vmem [shape: bf16[32,256], index: 1, kind: input, shape index: {}]
  %s2 = inlined_call_operand.hbm [shape: bf16[256,256], index: 2, kind: output, shape index: {}]
  %s3 = sld [smem:[#allocation0]]
  $region18: #{tpu_custom_call.1} parent=0
    _
  %s5 = ssub.s32 1, %s3
  %s6 = scalar_select 0, %s5, %s3
  $region1: #{tpu_custom_call.1} parent=0
    #allocation2 [shape = 'u8[131072]{0}', space=vmem, size = 0x20000, scoped, tag = 'output window, operand 0, single buffered']
    #allocation3 [shape = 's32[1]{0}', space=sflag, size = 0x4, scoped, tag = 'scoped memory for tpu_custom_call.1']
    %7 = vsyncpa [#allocation3], 0
    // Predicated region
    $region2: #{tpu_custom_call.1} parent=1 // pred_check
      _
    $region3: #{tpu_custom_call.1} parent=1 // pred_check_branch
      %9 = sbr.rel (0) target = $region5
    $region4: #{tpu_custom_call.1} parent=1 // pred_region
      _
    $region5: #{tpu_custom_call.1} parent=1 // pred_fallthru
      _
    // Predicated region
    $region6: #{tpu_custom_call.1} parent=1 // pred_check
      _
    $region7: #{tpu_custom_call.1} parent=1 // pred_check_branch
      %11 = sbr.rel (0) target = $region9
    $region8: #{tpu_custom_call.1} parent=1 // pred_region
      _
    $region9: #{tpu_custom_call.1} parent=1 // pred_fallthru
      _
    %v13 = vld [vmem:[%s0] sm:$0xf]
    %v14 = vld [vmem:[%s0 + $0x4] sm:$0xf]
    %v15 = vld [vmem:[%s0 + $0x8] sm:$0xf]
    %v16 = vld [vmem:[%s0 + $0xc] sm:$0xf]
    %v17 = vld [vmem:[%s0 + $0x10] sm:$0xf]
    %v18 = vld [vmem:[%s0 + $0x14] sm:$0xf]
    %v19 = vld [vmem:[%s0 + $0x18] sm:$0xf]
    %v20 = vld [vmem:[%s0 + $0x1c] sm:$0xf]
    %v21 = vld [vmem:[%s0 + $0x20] sm:$0xf]
    %v22 = vld [vmem:[%s0 + $0x24] sm:$0xf]
    %v23 = vld [vmem:[%s0 + $0x28] sm:$0xf]
    %v24 = vld [vmem:[%s0 + $0x2c] sm:$0xf]
    %v25 = vld [vmem:[%s0 + $0x30] sm:$0xf]
    %v26 = vld [vmem:[%s0 + $0x34] sm:$0xf]
    %v27 = vld [vmem:[%s0 + $0x38] sm:$0xf]
    %v28 = vld [vmem:[%s0 + $0x3c] sm:$0xf]
    %v29 = vld [vmem:[%s0 + $0x40] sm:$0xf]
    %v30 = vld [vmem:[%s0 + $0x44] sm:$0xf]
    %v31 = vld [vmem:[%s0 + $0x48] sm:$0xf]
    %v32 = vld [vmem:[%s0 + $0x4c] sm:$0xf]
    %v33 = vld [vmem:[%s0 + $0x50] sm:$0xf]
    %v34 = vld [vmem:[%s0 + $0x54] sm:$0xf]
    %v35 = vld [vmem:[%s0 + $0x58] sm:$0xf]
    %v36 = vld [vmem:[%s0 + $0x5c] sm:$0xf]
    %v37 = vld [vmem:[%s0 + $0x60] sm:$0xf]
    %v38 = vld [vmem:[%s0 + $0x64] sm:$0xf]
    %v39 = vld [vmem:[%s0 + $0x68] sm:$0xf]
    %v40 = vld [vmem:[%s0 + $0x6c] sm:$0xf]
    %v41 = vld [vmem:[%s0 + $0x70] sm:$0xf]
    %v42 = vld [vmem:[%s0 + $0x74] sm:$0xf]
    %v43 = vld [vmem:[%s0 + $0x78] sm:$0xf]
    %v44 = vld [vmem:[%s0 + $0x7c] sm:$0xf]
    %v45 = vld [vmem:[%s1] sm:$0xff]
    %v46 = vld [vmem:[%s1 + $0x8] sm:$0xff]
    %v47 = vld [vmem:[%s1 + $0x10] sm:$0xff]
    %v48 = vld [vmem:[%s1 + $0x18] sm:$0xff]
    %v81 = vunpack.c.l.b16 %v13
    %v82 = vunpack.c.l.b16 %v14
    %v83 = vunpack.c.l.b16 %v15
    %v84 = vunpack.c.l.b16 %v16
    %v85 = vunpack.c.l.b16 %v17
    %v86 = vunpack.c.l.b16 %v18
    %v87 = vunpack.c.l.b16 %v19
    %v88 = vunpack.c.l.b16 %v20
    %v89 = vunpack.c.l.b16 %v21
    %v90 = vunpack.c.l.b16 %v22
    %v91 = vunpack.c.l.b16 %v23
    %v92 = vunpack.c.l.b16 %v24
    %v93 = vunpack.c.l.b16 %v25
    %v94 = vunpack.c.l.b16 %v26
    %v95 = vunpack.c.l.b16 %v27
    %v96 = vunpack.c.l.b16 %v28
    %v97 = vunpack.c.l.b16 %v29
    %v98 = vunpack.c.l.b16 %v30
    %v99 = vunpack.c.l.b16 %v31
    %v100 = vunpack.c.l.b16 %v32
    %v101 = vunpack.c.l.b16 %v33
    %v102 = vunpack.c.l.b16 %v34
    %v103 = vunpack.c.l.b16 %v35
    %v104 = vunpack.c.l.b16 %v36
    %v105 = vunpack.c.l.b16 %v37
    %v106 = vunpack.c.l.b16 %v38
    %v107 = vunpack.c.l.b16 %v39
    %v108 = vunpack.c.l.b16 %v40
    %v109 = vunpack.c.l.b16 %v41
    %v110 = vunpack.c.l.b16 %v42
    %v111 = vunpack.c.l.b16 %v43
    %v112 = vunpack.c.l.b16 %v44
    %v113 = vpack.c.b16 %v82, %v81
    %v114 = vpack.c.b16 %v84, %v83
    %v115 = vpack.c.b16 %v86, %v85
    %v116 = vpack.c.b16 %v88, %v87
    %v117 = vpack.c.b16 %v90, %v89
    %v118 = vpack.c.b16 %v92, %v91
    %v119 = vpack.c.b16 %v94, %v93
    %v120 = vpack.c.b16 %v96, %v95
    %v121 = vpack.c.b16 %v98, %v97
    %v122 = vpack.c.b16 %v100, %v99
    %v123 = vpack.c.b16 %v102, %v101
    %v124 = vpack.c.b16 %v104, %v103
    %v125 = vpack.c.b16 %v106, %v105
    %v126 = vpack.c.b16 %v108, %v107
    %v127 = vpack.c.b16 %v110, %v109
    %v128 = vpack.c.b16 %v112, %v111
    %v133 = vunpack.c.l.b16 %v45
    %v134 = vunpack.c.h.b16 %v45
    %v135 = vunpack.c.l.b16 %v46
    %v136 = vunpack.c.h.b16 %v46
    %v137 = vunpack.c.l.b16 %v47
    %v138 = vunpack.c.h.b16 %v47
    %v139 = vunpack.c.l.b16 %v48
    %v140 = vunpack.c.h.b16 %v48
    %v141 = vpack.c.b16 %v135, %v133
    %v142 = vpack.c.b16 %v136, %v134
    %v143 = vpack.c.b16 %v139, %v137
    %v144 = vpack.c.b16 %v140, %v138
    %vm149 = vcmask 261120
    %v151 = vsel %vm149, %v113, 0
    %v154 = vsel %vm149, %v114, 0
    %v157 = vsel %vm149, %v115, 0
    %v160 = vsel %vm149, %v116, 0
    %v163 = vsel %vm149, %v117, 0
    %v166 = vsel %vm149, %v118, 0
    %v169 = vsel %vm149, %v119, 0
    %v172 = vsel %vm149, %v120, 0
    %v175 = vsel %vm149, %v121, 0
    %v178 = vsel %vm149, %v122, 0
    %v181 = vsel %vm149, %v123, 0
    %v184 = vsel %vm149, %v124, 0
    %v187 = vsel %vm149, %v125, 0
    %v190 = vsel %vm149, %v126, 0
    %v193 = vsel %vm149, %v127, 0
    %v196 = vsel %vm149, %v128, 0
    %198 = vmatprep.subr.bf16.mxu0 %v142
    %199 = vmatpush1.bf16.msra.mxu0 %v141
    %200 = vmatprep.subr.bf16.mxu0 %v144
    %201 = vmatpush1.bf16.msra.mxu0 %v143
    %202 = vmatprep.subr.bf16.mxu0 0
    %203 = vmatpush1.bf16.msra.mxu0 0
    %204 = vmatprep.subr.bf16.mxu0 0
    %205 = vmatpush1.bf16.msra.mxu0 0
    %206 = vmatprep.subr.bf16.mxu0 0
    %207 = vmatpush1.bf16.msra.mxu0 0
    %208 = vmatprep.subr.bf16.mxu0 0
    %209 = vmatpush1.bf16.msra.mxu0 0
    %210 = vmatprep.subr.bf16.mxu0 0
    %211 = vmatpush1.bf16.msra.mxu0 0
    %212 = vmatprep.subr.bf16.mxu0 0
    %213 = vmatpush1.bf16.msra.mxu0 0
    %214 = vmatprep.subr.bf16.mxu0 0
    %215 = vmatpush1.bf16.msra.mxu0 0
    %216 = vmatprep.subr.bf16.mxu0 0
    %217 = vmatpush1.bf16.msra.mxu0 0
    %218 = vmatprep.subr.bf16.mxu0 0
    %219 = vmatpush1.bf16.msra.mxu0 0
    %220 = vmatprep.subr.bf16.mxu0 0
    %221 = vmatpush1.bf16.msra.mxu0 0
    %222 = vmatprep.subr.bf16.mxu0 0
    %223 = vmatpush1.bf16.msra.mxu0 0
    %224 = vmatprep.subr.bf16.mxu0 0
    %225 = vmatpush1.bf16.msra.mxu0 0
    %226 = vmatprep.subr.bf16.mxu0 0
    %227 = vmatpush1.bf16.msra.mxu0 0
    %228 = vmatprep.subr.bf16.mxu0 0
    %229 = vmatpush1.bf16.msra.mxu0 0
    %230 = vmatprep.mubr.bf16.mxu0 0
    %231 = vmatmul.mubr.bf16.gmra.mrb[0].mxu0 %v151
    %v232 = vpop.f32.mrb[0].mxu0
    %v233 = vadd.f32 0.0, %v232
    %v234 = vpop.f32.mrb[0].mxu0
    %v235 = vadd.f32 0.0, %v234
    %v236 = vpop.f32.mrb[0].mxu0
    %v237 = vadd.f32 0.0, %v236
    %v238 = vpop.f32.mrb[0].mxu0
    %v239 = vadd.f32 0.0, %v238
    %240 = vmatprep.mubr.bf16.mxu0 0
    %241 = vmatmul.mubr.bf16.gmra.mrb[0].mxu0 %v154
    %v242 = vpop.f32.mrb[0].mxu0
    %v243 = vadd.f32 0.0, %v242
    %v244 = vpop.f32.mrb[0].mxu0
    %v245 = vadd.f32 0.0, %v244
    %v246 = vpop.f32.mrb[0].mxu0
    %v247 = vadd.f32 0.0, %v246
    %v248 = vpop.f32.mrb[0].mxu0
    %v249 = vadd.f32 0.0, %v248
    %250 = vmatprep.mubr.bf16.mxu0 0
    %251 = vmatmul.mubr.bf16.gmra.mrb[0].mxu0 %v157
    %v252 = vpop.f32.mrb[0].mxu0
    %v253 = vadd.f32 0.0, %v252
    %v254 = vpop.f32.mrb[0].mxu0
    %v255 = vadd.f32 0.0, %v254
    %v256 = vpop.f32.mrb[0].mxu0
    %v257 = vadd.f32 0.0, %v256
    %v258 = vpop.f32.mrb[0].mxu0
    %v259 = vadd.f32 0.0, %v258
    %260 = vmatprep.mubr.bf16.mxu0 0
    %261 = vmatmul.mubr.bf16.gmra.mrb[0].mxu0 %v160
    %v262 = vpop.f32.mrb[0].mxu0
    %v263 = vadd.f32 0.0, %v262
    %v264 = vpop.f32.mrb[0].mxu0
    %v265 = vadd.f32 0.0, %v264
    %v266 = vpop.f32.mrb[0].mxu0
    %v267 = vadd.f32 0.0, %v266
    %v268 = vpop.f32.mrb[0].mxu0
    %v269 = vadd.f32 0.0, %v268
    %270 = vmatprep.mubr.bf16.mxu0 0
    %271 = vmatmul.mubr.bf16.gmra.mrb[0].mxu0 %v163
    %v272 = vpop.f32.mrb[0].mxu0
    %v273 = vadd.f32 0.0, %v272
    %v274 = vpop.f32.mrb[0].mxu0
    %v275 = vadd.f32 0.0, %v274
    %v276 = vpop.f32.mrb[0].mxu0
    %v277 = vadd.f32 0.0, %v276
    %v278 = vpop.f32.mrb[0].mxu0
    %v279 = vadd.f32 0.0, %v278
    %280 = vmatprep.mubr.bf16.mxu0 0
    %281 = vmatmul.mubr.bf16.gmra.mrb[0].mxu0 %v166
    %v282 = vpop.f32.mrb[0].mxu0
    %v283 = vadd.f32 0.0, %v282
    %v284 = vpop.f32.mrb[0].mxu0
    %v285 = vadd.f32 0.0, %v284
    %v286 = vpop.f32.mrb[0].mxu0
    %v287 = vadd.f32 0.0, %v286
    %v288 = vpop.f32.mrb[0].mxu0
    %v289 = vadd.f32 0.0, %v288
    %290 = vmatprep.mubr.bf16.mxu0 0
    %291 = vmatmul.mubr.bf16.gmra.mrb[0].mxu0 %v169
    %v292 = vpop.f32.mrb[0].mxu0
    %v293 = vadd.f32 0.0, %v292
    %v294 = vpop.f32.mrb[0].mxu0
    %v295 = vadd.f32 0.0, %v294
    %v296 = vpop.f32.mrb[0].mxu0
    %v297 = vadd.f32 0.0, %v296
    %v298 = vpop.f32.mrb[0].mxu0
    %v299 = vadd.f32 0.0, %v298
    %300 = vmatprep.mubr.bf16.mxu0 0
    %301 = vmatmul.mubr.bf16.gmra.mrb[0].mxu0 %v172
    %v302 = vpop.f32.mrb[0].mxu0
    %v303 = vadd.f32 0.0, %v302
    %v304 = vpop.f32.mrb[0].mxu0
    %v305 = vadd.f32 0.0, %v304
    %v306 = vpop.f32.mrb[0].mxu0
    %v307 = vadd.f32 0.0, %v306
    %v308 = vpop.f32.mrb[0].mxu0
    %v309 = vadd.f32 0.0, %v308
    %310 = vmatprep.mubr.bf16.mxu0 0
    %311 = vmatmul.mubr.bf16.gmra.mrb[0].mxu0 %v175
    %v312 = vpop.f32.mrb[0].mxu0
    %v313 = vadd.f32 0.0, %v312
    %v314 = vpop.f32.mrb[0].mxu0
    %v315 = vadd.f32 0.0, %v314
    %v316 = vpop.f32.mrb[0].mxu0
    %v317 = vadd.f32 0.0, %v316
    %v318 = vpop.f32.mrb[0].mxu0
    %v319 = vadd.f32 0.0, %v318
    %320 = vmatprep.mubr.bf16.mxu0 0
    %321 = vmatmul.mubr.bf16.gmra.mrb[0].mxu0 %v178
    %v322 = vpop.f32.mrb[0].mxu0
    %v323 = vadd.f32 0.0, %v322
    %v324 = vpop.f32.mrb[0].mxu0
    %v325 = vadd.f32 0.0, %v324
    %v326 = vpop.f32.mrb[0].mxu0
    %v327 = vadd.f32 0.0, %v326
    %v328 = vpop.f32.mrb[0].mxu0
    %v329 = vadd.f32 0.0, %v328
    %330 = vmatprep.mubr.bf16.mxu0 0
    %331 = vmatmul.mubr.bf16.gmra.mrb[0].mxu0 %v181
    %v332 = vpop.f32.mrb[0].mxu0
    %v333 = vadd.f32 0.0, %v332
    %v334 = vpop.f32.mrb[0].mxu0
    %v335 = vadd.f32 0.0, %v334
    %v336 = vpop.f32.mrb[0].mxu0
    %v337 = vadd.f32 0.0, %v336
    %v338 = vpop.f32.mrb[0].mxu0
    %v339 = vadd.f32 0.0, %v338
    %340 = vmatprep.mubr.bf16.mxu0 0
    %341 = vmatmul.mubr.bf16.gmra.mrb[0].mxu0 %v184
    %v342 = vpop.f32.mrb[0].mxu0
    %v343 = vadd.f32 0.0, %v342
    %v344 = vpop.f32.mrb[0].mxu0
    %v345 = vadd.f32 0.0, %v344
    %v346 = vpop.f32.mrb[0].mxu0
    %v347 = vadd.f32 0.0, %v346
    %v348 = vpop.f32.mrb[0].mxu0
    %v349 = vadd.f32 0.0, %v348
    %350 = vmatprep.mubr.bf16.mxu0 0
    %351 = vmatmul.mubr.bf16.gmra.mrb[0].mxu0 %v187
    %v352 = vpop.f32.mrb[0].mxu0
    %v353 = vadd.f32 0.0, %v352
    %v354 = vpop.f32.mrb[0].mxu0
    %v355 = vadd.f32 0.0, %v354
    %v356 = vpop.f32.mrb[0].mxu0
    %v357 = vadd.f32 0.0, %v356
    %v358 = vpop.f32.mrb[0].mxu0
    %v359 = vadd.f32 0.0, %v358
    %360 = vmatprep.mubr.bf16.mxu0 0
    %361 = vmatmul.mubr.bf16.gmra.mrb[0].mxu0 %v190
    %v362 = vpop.f32.mrb[0].mxu0
    %v363 = vadd.f32 0.0, %v362
    %v364 = vpop.f32.mrb[0].mxu0
    %v365 = vadd.f32 0.0, %v364
    %v366 = vpop.f32.mrb[0].mxu0
    %v367 = vadd.f32 0.0, %v366
    %v368 = vpop.f32.mrb[0].mxu0
    %v369 = vadd.f32 0.0, %v368
    %370 = vmatprep.mubr.bf16.mxu0 0
    %371 = vmatmul.mubr.bf16.gmra.mrb[0].mxu0 %v193
    %v372 = vpop.f32.mrb[0].mxu0
    %v373 = vadd.f32 0.0, %v372
    %v374 = vpop.f32.mrb[0].mxu0
    %v375 = vadd.f32 0.0, %v374
    %v376 = vpop.f32.mrb[0].mxu0
    %v377 = vadd.f32 0.0, %v376
    %v378 = vpop.f32.mrb[0].mxu0
    %v379 = vadd.f32 0.0, %v378
    %380 = vmatprep.mubr.bf16.mxu0 0
    %381 = vmatmul.mubr.bf16.gmra.mrb[0].mxu0 %v196
    %v382 = vpop.f32.mrb[0].mxu0
    %v383 = vadd.f32 0.0, %v382
    %v384 = vpop.f32.mrb[0].mxu0
    %v385 = vadd.f32 0.0, %v384
    %v386 = vpop.f32.mrb[0].mxu0
    %v387 = vadd.f32 0.0, %v386
    %v388 = vpop.f32.mrb[0].mxu0
    %v389 = vadd.f32 0.0, %v388
    %390 = vdwg.mxu0
    %v391 = vpack.c.bf16 %v237, %v233
    %v392 = vpack.c.bf16 %v239, %v235
    %v393 = vpack.c.bf16 %v247, %v243
    %v394 = vpack.c.bf16 %v249, %v245
    %v395 = vpack.c.bf16 %v257, %v253
    %v396 = vpack.c.bf16 %v259, %v255
    %v397 = vpack.c.bf16 %v267, %v263
    %v398 = vpack.c.bf16 %v269, %v265
    %v399 = vpack.c.bf16 %v277, %v273
    %v400 = vpack.c.bf16 %v279, %v275
    %v401 = vpack.c.bf16 %v287, %v283
    %v402 = vpack.c.bf16 %v289, %v285
    %v403 = vpack.c.bf16 %v297, %v293
    %v404 = vpack.c.bf16 %v299, %v295
    %v405 = vpack.c.bf16 %v307, %v303
    %v406 = vpack.c.bf16 %v309, %v305
    %v407 = vpack.c.bf16 %v317, %v313
    %v408 = vpack.c.bf16 %v319, %v315
    %v409 = vpack.c.bf16 %v327, %v323
    %v410 = vpack.c.bf16 %v329, %v325
    %v411 = vpack.c.bf16 %v337, %v333
    %v412 = vpack.c.bf16 %v339, %v335
    %v413 = vpack.c.bf16 %v347, %v343
    %v414 = vpack.c.bf16 %v349, %v345
    %v415 = vpack.c.bf16 %v357, %v353
    %v416 = vpack.c.bf16 %v359, %v355
    %v417 = vpack.c.bf16 %v367, %v363
    %v418 = vpack.c.bf16 %v369, %v365
    %v419 = vpack.c.bf16 %v377, %v373
    %v420 = vpack.c.bf16 %v379, %v375
    %v421 = vpack.c.bf16 %v387, %v383
    %v422 = vpack.c.bf16 %v389, %v385
    %v455 = vunpack.c.l.b16 %v391
    %v456 = vunpack.c.l.b16 %v392
    %v457 = vunpack.c.h.b16 %v391
    %v458 = vunpack.c.h.b16 %v392
    %v459 = vunpack.c.l.b16 %v393
    %v460 = vunpack.c.l.b16 %v394
    %v461 = vunpack.c.h.b16 %v393
    %v462 = vunpack.c.h.b16 %v394
    %v463 = vunpack.c.l.b16 %v395
    %v464 = vunpack.c.l.b16 %v396
    %v465 = vunpack.c.h.b16 %v395
    %v466 = vunpack.c.h.b16 %v396
    %v467 = vunpack.c.l.b16 %v397
    %v468 = vunpack.c.l.b16 %v398
    %v469 = vunpack.c.h.b16 %v397
    %v470 = vunpack.c.h.b16 %v398
    %v471 = vunpack.c.l.b16 %v399
    %v472 = vunpack.c.l.b16 %v400
    %v473 = vunpack.c.h.b16 %v399
    %v474 = vunpack.c.h.b16 %v400
    %v475 = vunpack.c.l.b16 %v401
    %v476 = vunpack.c.l.b16 %v402
    %v477 = vunpack.c.h.b16 %v401
    %v478 = vunpack.c.h.b16 %v402
    %v479 = vunpack.c.l.b16 %v403
    %v480 = vunpack.c.l.b16 %v404
    %v481 = vunpack.c.h.b16 %v403
    %v482 = vunpack.c.h.b16 %v404
    %v483 = vunpack.c.l.b16 %v405
    %v484 = vunpack.c.l.b16 %v406
    %v485 = vunpack.c.h.b16 %v405
    %v486 = vunpack.c.h.b16 %v406
    %v487 = vunpack.c.l.b16 %v407
    %v488 = vunpack.c.l.b16 %v408
    %v489 = vunpack.c.h.b16 %v407
    %v490 = vunpack.c.h.b16 %v408
    %v491 = vunpack.c.l.b16 %v409
    %v492 = vunpack.c.l.b16 %v410
    %v493 = vunpack.c.h.b16 %v409
    %v494 = vunpack.c.h.b16 %v410
    %v495 = vunpack.c.l.b16 %v411
    %v496 = vunpack.c.l.b16 %v412
    %v497 = vunpack.c.h.b16 %v411
    %v498 = vunpack.c.h.b16 %v412
    %v499 = vunpack.c.l.b16 %v413
    %v500 = vunpack.c.l.b16 %v414
    %v501 = vunpack.c.h.b16 %v413
    %v502 = vunpack.c.h.b16 %v414
    %v503 = vunpack.c.l.b16 %v415
    %v504 = vunpack.c.l.b16 %v416
    %v505 = vunpack.c.h.b16 %v415
    %v506 = vunpack.c.h.b16 %v416
    %v507 = vunpack.c.l.b16 %v417
    %v508 = vunpack.c.l.b16 %v418
    %v509 = vunpack.c.h.b16 %v417
    %v510 = vunpack.c.h.b16 %v418
    %v511 = vunpack.c.l.b16 %v419
    %v512 = vunpack.c.l.b16 %v420
    %v513 = vunpack.c.h.b16 %v419
    %v514 = vunpack.c.h.b16 %v420
    %v515 = vunpack.c.l.b16 %v421
    %v516 = vunpack.c.l.b16 %v422
    %v517 = vunpack.c.h.b16 %v421
    %v518 = vunpack.c.h.b16 %v422
    %v519 = vpack.c.b16 %v456, %v455
    %v520 = vpack.c.b16 %v458, %v457
    %v521 = vpack.c.b16 %v460, %v459
    %v522 = vpack.c.b16 %v462, %v461
    %v523 = vpack.c.b16 %v464, %v463
    %v524 = vpack.c.b16 %v466, %v465
    %v525 = vpack.c.b16 %v468, %v467
    %v526 = vpack.c.b16 %v470, %v469
    %v527 = vpack.c.b16 %v472, %v471
    %v528 = vpack.c.b16 %v474, %v473
    %v529 = vpack.c.b16 %v476, %v475
    %v530 = vpack.c.b16 %v478, %v477
    %v531 = vpack.c.b16 %v480, %v479
    %v532 = vpack.c.b16 %v482, %v481
    %v533 = vpack.c.b16 %v484, %v483
    %v534 = vpack.c.b16 %v486, %v485
    %v535 = vpack.c.b16 %v488, %v487
    %v536 = vpack.c.b16 %v490, %v489
    %v537 = vpack.c.b16 %v492, %v491
    %v538 = vpack.c.b16 %v494, %v493
    %v539 = vpack.c.b16 %v496, %v495
    %v540 = vpack.c.b16 %v498, %v497
    %v541 = vpack.c.b16 %v500, %v499
    %v542 = vpack.c.b16 %v502, %v501
    %v543 = vpack.c.b16 %v504, %v503
    %v544 = vpack.c.b16 %v506, %v505
    %v545 = vpack.c.b16 %v508, %v507
    %v546 = vpack.c.b16 %v510, %v509
    %v547 = vpack.c.b16 %v512, %v511
    %v548 = vpack.c.b16 %v514, %v513
    %v549 = vpack.c.b16 %v516, %v515
    %v550 = vpack.c.b16 %v518, %v517
    %583 = vst [vmem:[#allocation2] sm:$0xff] %v519
    %584 = vst [vmem:[#allocation2 + $0x8] sm:$0xff] %v520
    %585 = vst [vmem:[#allocation2 + $0x10] sm:$0xff] %v521
    %586 = vst [vmem:[#allocation2 + $0x18] sm:$0xff] %v522
    %587 = vst [vmem:[#allocation2 + $0x20] sm:$0xff] %v523
    %588 = vst [vmem:[#allocation2 + $0x28] sm:$0xff] %v524
    %589 = vst [vmem:[#allocation2 + $0x30] sm:$0xff] %v525
    %590 = vst [vmem:[#allocation2 + $0x38] sm:$0xff] %v526
    %591 = vst [vmem:[#allocation2 + $0x40] sm:$0xff] %v527
    %592 = vst [vmem:[#allocation2 + $0x48] sm:$0xff] %v528
    %593 = vst [vmem:[#allocation2 + $0x50] sm:$0xff] %v529
    %594 = vst [vmem:[#allocation2 + $0x58] sm:$0xff] %v530
    %595 = vst [vmem:[#allocation2 + $0x60] sm:$0xff] %v531
    %596 = vst [vmem:[#allocation2 + $0x68] sm:$0xff] %v532
    %597 = vst [vmem:[#allocation2 + $0x70] sm:$0xff] %v533
    %598 = vst [vmem:[#allocation2 + $0x78] sm:$0xff] %v534
    %599 = vst [vmem:[#allocation2 + $0x80] sm:$0xff] %v535
    %600 = vst [vmem:[#allocation2 + $0x88] sm:$0xff] %v536
    %601 = vst [vmem:[#allocation2 + $0x90] sm:$0xff] %v537
    %602 = vst [vmem:[#allocation2 + $0x98] sm:$0xff] %v538
    %603 = vst [vmem:[#allocation2 + $0xa0] sm:$0xff] %v539
    %604 = vst [vmem:[#allocation2 + $0xa8] sm:$0xff] %v540
    %605 = vst [vmem:[#allocation2 + $0xb0] sm:$0xff] %v541
    %606 = vst [vmem:[#allocation2 + $0xb8] sm:$0xff] %v542
    %607 = vst [vmem:[#allocation2 + $0xc0] sm:$0xff] %v543
    %608 = vst [vmem:[#allocation2 + $0xc8] sm:$0xff] %v544
    %609 = vst [vmem:[#allocation2 + $0xd0] sm:$0xff] %v545
    %610 = vst [vmem:[#allocation2 + $0xd8] sm:$0xff] %v546
    %611 = vst [vmem:[#allocation2 + $0xe0] sm:$0xff] %v547
    %612 = vst [vmem:[#allocation2 + $0xe8] sm:$0xff] %v548
    %613 = vst [vmem:[#allocation2 + $0xf0] sm:$0xff] %v549
    %614 = vst [vmem:[#allocation2 + $0xf8] sm:$0xff] %v550
    // Predicated region
    $region10: #{tpu_custom_call.1} parent=1 // pred_check
      _
    $region11: #{tpu_custom_call.1} parent=1 // pred_check_branch
      %616 = sbr.rel (0) target = $region13
    $region12: #{tpu_custom_call.1} parent=1 // pred_region
      %s618 = ssub.s32 4096, 4096
      %619 = vsyncadd [#allocation3], %s618
      %s620 = sshll.u32 [#allocation2], 4
      %s621 = int_to_ptr.vmem [resolvable:$true] %s620
      %626 = dma.vmem_to_hbm [thread:$0]  %s621, 4096, %s2, [#allocation3], 128, 128, 8
    $region13: #{tpu_custom_call.1} parent=1 // pred_fallthru
      _
    // Predicated region
    $region14: #{tpu_custom_call.1} parent=1 // pred_check
      _
    $region15: #{tpu_custom_call.1} parent=1 // pred_check_branch
      %628 = sbr.rel (0) target = $region17
    $region16: #{tpu_custom_call.1} parent=1 // pred_region
      %629 = dma.done [#allocation3], 4096
    $region17: #{tpu_custom_call.1} parent=1 // pred_fallthru
      _
    %630 = vsyncpa [#allocation3], 1

</llo_original>
